<compile_context>
chip_gen: v6e
topology: v6e:2x2x1
jax: 0.10.0
libtpu: 0.0.40
codegen_flags: <defaults>
</compile_context>

<pallas_src>
import jax
import jax.numpy as jnp
from jax.experimental import pallas as pl
from jax.experimental.pallas import tpu as pltpu

HIDDEN = 256      # first linear output features
NUM_CLASSES = 2   # real logit count
C_PAD = 128       # lane-dense padded logit width


def _round_up(n, m):
    return ((n + m - 1) // m) * m


def _mlp_kernel(x_ref, w1_ref, shift_ref, w2_ref, b2_ref, out_ref):
    # Linear1 with BN scale folded into the weights: (TB, D)bf16 @ (D, 256)bf16
    # accumulated in f32 on the MXU.
    h = jnp.dot(x_ref[...], w1_ref[...], preferred_element_type=jnp.float32)
    # BN shift (beta - mean*scale) + ReLU in f32.
    h = jnp.maximum(h + shift_ref[...], 0.0)
    # Dropout: identity in eval mode.
    # Linear2 (lane-dense padded to 128 output cols): (TB, 256)bf16 @ (256, 128)bf16
    out = jnp.dot(h.astype(w2_ref.dtype), w2_ref[...],
                  preferred_element_type=jnp.float32) + b2_ref[...]
    out_ref[...] = out.astype(out_ref.dtype)


def _vmem_estimate_bytes(tile_b, d, h):
    # Conservative: assume everything is double-buffered.
    x_bufs = 2 * tile_b * d * 2                  # bf16 x tiles
    out_bufs = 2 * tile_b * C_PAD * 4            # f32 output tiles
    w1 = 2 * d * h * 2                           # bf16 resident weights
    w2 = 2 * h * C_PAD * 2
    small = 2 * (h + C_PAD) * 4
    return x_bufs + out_bufs + w1 + w2 + small


def collision_model_forward(x, params, tile_b_max=512):
    """Fused forward pass. Returns logits of shape (B, 2) before squeeze."""
    B, D = x.shape
    H = params["w1s_t"].shape[1]

    # Pick a batch tile: as large as reasonable, multiple of 8, and sized so
    # the kernel also fits v7x's 64 MiB VMEM (~48 MiB budget with headroom).
    tile_b = min(tile_b_max, _round_up(B, 8))
    while tile_b > 8 and _vmem_estimate_bytes(tile_b, D, H) > 48 * 1024 * 1024:
        tile_b //= 2
    tile_b = max(8, _round_up(tile_b, 8))

    B_pad = _round_up(B, tile_b)
    if B_pad != B:
        x = jnp.pad(x, ((0, B_pad - B), (0, 0)))
    x = x.astype(jnp.bfloat16)

    grid = (B_pad // tile_b,)
    vmem_limit = int(min(max(_vmem_estimate_bytes(tile_b, D, H) * 1.2,
                             32 * 1024 * 1024), 64 * 1024 * 1024))

    out = pl.pallas_call(
        _mlp_kernel,
        out_shape=jax.ShapeDtypeStruct((B_pad, C_PAD), jnp.float32),
        grid_spec=pltpu.PrefetchScalarGridSpec(
            num_scalar_prefetch=0,
            grid=grid,
            in_specs=[
                pl.BlockSpec((tile_b, D), lambda i: (i, 0)),   # x: batch-tiled
                pl.BlockSpec((D, H), lambda i: (0, 0)),        # w1 (scale-folded), resident
                pl.BlockSpec((1, H), lambda i: (0, 0)),        # BN shift, resident
                pl.BlockSpec((H, C_PAD), lambda i: (0, 0)),    # w2 padded, resident
                pl.BlockSpec((1, C_PAD), lambda i: (0, 0)),    # b2 padded, resident
            ],
            out_specs=pl.BlockSpec((tile_b, C_PAD), lambda i: (i, 0)),
        ),
        compiler_params=pltpu.CompilerParams(
            dimension_semantics=("parallel",),   # shard batch tiles across TCs (v7x)
            vmem_limit_bytes=vmem_limit,
        ),
    )(x, params["w1s_t"], params["shift"], params["w2_pad_t"], params["b2_pad"])

    # Drop batch padding and the lane padding of the logits.
    return out[:B, :NUM_CLASSES]


def model_forward(x, params):
    logits = collision_model_forward(x, params)
    # match PyTorch `logits.squeeze()`
    return jnp.squeeze(logits)


def init_params(key, input_size, hidden=HIDDEN, num_classes=NUM_CLASSES, eps=1e-5):
    k1, k2, k3, k4, k5, k6, k7 = jax.random.split(key, 7)
    # Linear(input_size, 256, bias=False): weight (256, D)
    bound1 = 1.0 / (input_size ** 0.5)
    w1 = jax.random.uniform(k1, (hidden, input_size), jnp.float32, -bound1, bound1)
    # BatchNorm1d(256) params + running stats (deterministic synthetic values)
    gamma = 1.0 + 0.01 * jax.random.normal(k2, (hidden,), jnp.float32)
    beta = 0.01 * jax.random.normal(k3, (hidden,), jnp.float32)
    running_mean = 0.05 * jax.random.normal(k4, (hidden,), jnp.float32)
    running_var = 1.0 + 0.1 * jax.random.uniform(k5, (hidden,), jnp.float32)
    scale = gamma / jnp.sqrt(running_var + eps)
    shift = beta - running_mean * scale
    # Fold BN scale into w1:  (x @ w1.T) * scale == x @ (w1.T * scale)
    w1s_t_f32 = w1.T * scale[None, :]                     # (D, 256)
    # Linear(256, 2)
    bound2 = 1.0 / (hidden ** 0.5)
    w2 = jax.random.uniform(k6, (num_classes, hidden), jnp.float32, -bound2, bound2)
    b2 = jax.random.uniform(k7, (num_classes,), jnp.float32, -bound2, bound2)
    # Lane-dense padding of the 2-wide output to 128 columns (zeros).
    w2_t_f32 = w2.T                                       # (256, 2)
    w2_pad_t = jnp.zeros((hidden, C_PAD), jnp.float32).at[:, :num_classes].set(w2_t_f32)
    b2_pad = jnp.zeros((1, C_PAD), jnp.float32).at[0, :num_classes].set(b2)
    return {
        # kernel operands (bf16 weights, f32 bias/shift)
        "w1s_t": w1s_t_f32.astype(jnp.bfloat16),          # (D, 256) bf16, scale folded
        "shift": shift.reshape(1, hidden),                # (1, 256) f32
        "w2_pad_t": w2_pad_t.astype(jnp.bfloat16),        # (256, 128) bf16
        "b2_pad": b2_pad,                                 # (1, 128) f32
        # f32 copies for the reference path
        "w1s_t_f32": w1s_t_f32,
        "w2_t_f32": w2_t_f32,
        "b2_f32": b2.reshape(1, num_classes),
    }


def reference_forward(x, params):
    """Pure-JAX f32 reference of the eval-mode forward."""
    h = x @ params["w1s_t_f32"] + params["shift"]
    h = jnp.maximum(h, 0.0)
    logits = h @ params["w2_t_f32"] + params["b2_f32"]
    return jnp.squeeze(logits)


if __name__ == "__main__":
    key = jax.random.PRNGKey(0)
    kx, kp, kx2 = jax.random.split(key, 3)

    # Small primary test: B multiple of 8, D multiple of 128 for clean tiling.
    B, D = 8, 128
    x = jax.random.normal(kx, (B, D), jnp.float32)
    params = init_params(kp, input_size=D)

    out = model_forward(x, params)
    out = jax.block_until_ready(out)
    ref = reference_forward(x, params)
    assert out.shape == ref.shape == (B, NUM_CLASSES)
    assert jnp.allclose(out, ref, atol=3e-2, rtol=3e-2), "mismatch vs reference (B=8)"

    # Second test: non-multiple batch to exercise batch padding / tiling path.
    B2 = 300
    x2 = jax.random.normal(kx2, (B2, D), jnp.float32)
    out2 = jax.block_until_ready(model_forward(x2, params))
    ref2 = reference_forward(x2, params)
    assert out2.shape == ref2.shape == (B2, NUM_CLASSES)
    assert jnp.allclose(out2, ref2, atol=3e-2, rtol=3e-2), "mismatch vs reference (B=300)"

    print("KERNEL_OK")
</pallas_src>

<mosaic_0001>
module attributes {stable_mosaic.version = 11 : i64} {
  func.func @_mlp_kernel(%arg0: i32, %arg1: memref<8x128xbf16, #tpu.memory_space<vmem>>, %arg2: memref<128x256xbf16, #tpu.memory_space<vmem>>, %arg3: memref<1x256xf32, #tpu.memory_space<vmem>>, %arg4: memref<256x128xbf16, #tpu.memory_space<vmem>>, %arg5: memref<1x128xf32, #tpu.memory_space<vmem>>, %arg6: memref<8x128xf32, #tpu.memory_space<vmem>>) attributes {dimension_semantics = [#tpu.dimension_semantics<parallel>], iteration_bounds = array<i64: 1>, scalar_prefetch = 0 : i64, scratch_operands = 0 : i64, tpu.core_type = #tpu.core_type<tc>, window_params = [{transform_indices = @transform_0, window_bounds = array<i64: 8, 128>}, {pipeline_mode = #tpu.pipeline_mode<synchronous>, transform_indices = @transform_1, window_bounds = array<i64: 128, 256>}, {pipeline_mode = #tpu.pipeline_mode<synchronous>, transform_indices = @transform_2, window_bounds = array<i64: 1, 256>}, {pipeline_mode = #tpu.pipeline_mode<synchronous>, transform_indices = @transform_3, window_bounds = array<i64: 256, 128>}, {pipeline_mode = #tpu.pipeline_mode<synchronous>, transform_indices = @transform_4, window_bounds = array<i64: 1, 128>}, {transform_indices = @transform_5, window_bounds = array<i64: 8, 128>}]} {
    %c0 = arith.constant 0 : index
    %c0_0 = arith.constant 0 : index
    %0 = vector.load %arg1[%c0, %c0_0] : memref<8x128xbf16, #tpu.memory_space<vmem>>, vector<8x128xbf16>
    %c0_1 = arith.constant 0 : index
    %c0_2 = arith.constant 0 : index
    %1 = vector.load %arg2[%c0_1, %c0_2] : memref<128x256xbf16, #tpu.memory_space<vmem>>, vector<128x256xbf16>
    %cst = arith.constant dense<0.000000e+00> : vector<8x256xf32>
    %2 = tpu.matmul %0, %1, %cst {dimension_numbers = #tpu.dot_dimension_numbers<[1], [0], [0], [1], [0, 0, 1, 1], [], []>} : vector<8x128xbf16>, vector<128x256xbf16>, vector<8x256xf32> -> vector<8x256xf32>
    %c0_3 = arith.constant 0 : index
    %c0_4 = arith.constant 0 : index
    %3 = vector.load %arg3[%c0_3, %c0_4] : memref<1x256xf32, #tpu.memory_space<vmem>>, vector<1x256xf32>
    %4 = vector.broadcast %3 : vector<1x256xf32> to vector<8x256xf32>
    %5 = arith.addf %2, %4 : vector<8x256xf32>
    %cst_5 = arith.constant 0.000000e+00 : f32
    %6 = vector.broadcast %cst_5 : f32 to vector<8x256xf32>
    %7 = arith.maximumf %5, %6 : vector<8x256xf32>
    %8 = arith.truncf %7 : vector<8x256xf32> to vector<8x256xbf16>
    %c0_6 = arith.constant 0 : index
    %c0_7 = arith.constant 0 : index
    %9 = vector.load %arg4[%c0_6, %c0_7] : memref<256x128xbf16, #tpu.memory_space<vmem>>, vector<256x128xbf16>
    %cst_8 = arith.constant dense<0.000000e+00> : vector<8x128xf32>
    %10 = tpu.matmul %8, %9, %cst_8 {dimension_numbers = #tpu.dot_dimension_numbers<[1], [0], [0], [1], [0, 0, 1, 1], [], []>} : vector<8x256xbf16>, vector<256x128xbf16>, vector<8x128xf32> -> vector<8x128xf32>
    %c0_9 = arith.constant 0 : index
    %c0_10 = arith.constant 0 : index
    %11 = vector.load %arg5[%c0_9, %c0_10] : memref<1x128xf32, #tpu.memory_space<vmem>>, vector<1x128xf32>
    %12 = vector.broadcast %11 : vector<1x128xf32> to vector<8x128xf32>
    %13 = arith.addf %10, %12 : vector<8x128xf32>
    %c0_11 = arith.constant 0 : index
    %c0_12 = arith.constant 0 : index
    %14 = vector.load %arg6[%c0_11, %c0_12] : memref<8x128xf32, #tpu.memory_space<vmem>>, vector<8x128xf32>
    tpu.vector_store %arg6[%c0_11, %c0_12], %13 {strides = array<i32>} : memref<8x128xf32, #tpu.memory_space<vmem>>, vector<8x128xf32>,
    return
  }
  func.func @transform_0(%arg0: i32) -> (i32, i32) {
    %c0_i32 = arith.constant 0 : i32
    %c0_i32_0 = arith.constant 0 : i32
    return %arg0, %c0_i32 : i32, i32
  }
  func.func @transform_1(%arg0: i32) -> (i32, i32) {
    %c0_i32 = arith.constant 0 : i32
    %c0_i32_0 = arith.constant 0 : i32
    %c0_i32_1 = arith.constant 0 : i32
    return %c0_i32, %c0_i32_0 : i32, i32
  }
  func.func @transform_2(%arg0: i32) -> (i32, i32) {
    %c0_i32 = arith.constant 0 : i32
    %c0_i32_0 = arith.constant 0 : i32
    %c0_i32_1 = arith.constant 0 : i32
    return %c0_i32, %c0_i32_0 : i32, i32
  }
  func.func @transform_3(%arg0: i32) -> (i32, i32) {
    %c0_i32 = arith.constant 0 : i32
    %c0_i32_0 = arith.constant 0 : i32
    %c0_i32_1 = arith.constant 0 : i32
    return %c0_i32, %c0_i32_0 : i32, i32
  }
  func.func @transform_4(%arg0: i32) -> (i32, i32) {
    %c0_i32 = arith.constant 0 : i32
    %c0_i32_0 = arith.constant 0 : i32
    %c0_i32_1 = arith.constant 0 : i32
    return %c0_i32, %c0_i32_0 : i32, i32
  }
  func.func @transform_5(%arg0: i32) -> (i32, i32) {
    %c0_i32 = arith.constant 0 : i32
    %c0_i32_0 = arith.constant 0 : i32
    return %arg0, %c0_i32 : i32, i32
  }
}

</mosaic_0001>

<llo_original>
// kernel: tpu_custom_call.1
$region0: #{tpu_custom_call.1}
  #allocation0 [shape = 'u32[]', space=smem, size = 0x4, offset = 0x4, fixed_abs, tag = 'smem constant byte address 0x4 - core index']
  #allocation1 [shape = 'u32[144,128]{1,0:T(1,128)}', space=vmem, size = 0x12000, scoped, tag = 'internal scratch']
  %s0 = inlined_call_operand.hbm [shape: bf16[8,128], index: 0, kind: input, shape index: {}]
  %s1 = inlined_call_operand.hbm [shape: bf16[128,256], index: 1, kind: input, shape index: {}]
  %s2 = inlined_call_operand.vmem [shape: f32[1,256], index: 2, kind: input, shape index: {}]
  %s3 = inlined_call_operand.hbm [shape: bf16[256,128], index: 3, kind: input, shape index: {}]
  %s4 = inlined_call_operand.vmem [shape: f32[1,128], index: 4, kind: input, shape index: {}]
  %s5 = inlined_call_operand.hbm [shape: f32[8,128], index: 5, kind: output, shape index: {}]
  %s6 = sld [smem:[#allocation0]]
  $region42: #{tpu_custom_call.1} parent=0
    _
  %s8 = ssub.s32 1, %s6
  %s9 = scalar_select 0, %s8, %s6
  $region1: #{tpu_custom_call.1} parent=0
    #allocation2 [shape = 'u8[2048]{0}', space=vmem, size = 0x800, scoped, tag = 'input window, operand 0, single buffered']
    #allocation3 [shape = 's32[1]{0}', space=sflag, size = 0x4, scoped, tag = 'scoped memory for tpu_custom_call.1']
    #allocation4 [shape = 's32[1]{0}', space=sflag, size = 0x4, scoped, tag = 'scoped memory for tpu_custom_call.1']
    #allocation5 [shape = 'u8[65536]{0}', space=vmem, size = 0x10000, scoped, tag = 'input window, operand 1, single buffered']
    #allocation6 [shape = 's32[1]{0}', space=sflag, size = 0x4, scoped, tag = 'scoped memory for tpu_custom_call.1']
    #allocation7 [shape = 'u8[65536]{0}', space=vmem, size = 0x10000, scoped, tag = 'input window, operand 3, single buffered']
    #allocation8 [shape = 'u8[4096]{0}', space=vmem, size = 0x1000, scoped, tag = 'output window, operand 0, single buffered']
    %10 = vsyncpa [#allocation3], 0
    %11 = vsyncpa [#allocation6], 0
    %12 = vsyncpa [#allocation4], 0
    // Predicated region
    $region2: #{tpu_custom_call.1} parent=1 // pred_check
      _
    $region3: #{tpu_custom_call.1} parent=1 // pred_check_branch
      %14 = sbr.rel (0) target = $region5
    $region4: #{tpu_custom_call.1} parent=1 // pred_region
      %s16 = ssub.s32 64, 64
      %17 = vsyncadd [#allocation3], %s16
      %s19 = sshll.u32 [#allocation2], 4
      %s20 = int_to_ptr.vmem [resolvable:$true] %s19
      %22 = dma.hbm_to_vmem [thread:$0]  %s0, 64, %s20, [#allocation3]
    $region5: #{tpu_custom_call.1} parent=1 // pred_fallthru
      _
    // Predicated region
    $region6: #{tpu_custom_call.1} parent=1 // pred_check
      _
    $region7: #{tpu_custom_call.1} parent=1 // pred_check_branch
      %24 = sbr.rel (0) target = $region9
    $region8: #{tpu_custom_call.1} parent=1 // pred_region
      %s26 = ssub.s32 2048, 2048
      %27 = vsyncadd [#allocation6], %s26
      %s28 = sshll.u32 [#allocation5], 4
      %s29 = int_to_ptr.vmem [resolvable:$true] %s28
      %34 = dma.hbm_to_vmem [thread:$0]  %s1, 2048, %s29, [#allocation6], 128, 128, 8
    $region9: #{tpu_custom_call.1} parent=1 // pred_fallthru
      _
    // Predicated region
    $region10: #{tpu_custom_call.1} parent=1 // pred_check
      _
    $region11: #{tpu_custom_call.1} parent=1 // pred_check_branch
      %36 = sbr.rel (0) target = $region13
    $region12: #{tpu_custom_call.1} parent=1 // pred_region
      _
    $region13: #{tpu_custom_call.1} parent=1 // pred_fallthru
      _
    // Predicated region
    $region14: #{tpu_custom_call.1} parent=1 // pred_check
      _
    $region15: #{tpu_custom_call.1} parent=1 // pred_check_branch
      %38 = sbr.rel (0) target = $region17
    $region16: #{tpu_custom_call.1} parent=1 // pred_region
      %s40 = ssub.s32 2048, 2048
      %41 = vsyncadd [#allocation6], %s40
      %s42 = sshll.u32 [#allocation7], 4
      %s43 = int_to_ptr.vmem [resolvable:$true] %s42
      %48 = dma.hbm_to_vmem [thread:$0]  %s3, 2048, %s43, [#allocation6], 64, 64, 4
    $region17: #{tpu_custom_call.1} parent=1 // pred_fallthru
      _
    // Predicated region
    $region18: #{tpu_custom_call.1} parent=1 // pred_check
      _
    $region19: #{tpu_custom_call.1} parent=1 // pred_check_branch
      %50 = sbr.rel (0) target = $region21
    $region20: #{tpu_custom_call.1} parent=1 // pred_region
      _
    $region21: #{tpu_custom_call.1} parent=1 // pred_fallthru
      _
    // Predicated region
    $region22: #{tpu_custom_call.1} parent=1 // pred_check
      _
    $region23: #{tpu_custom_call.1} parent=1 // pred_check_branch
      %52 = sbr.rel (0) target = $region25
    $region24: #{tpu_custom_call.1} parent=1 // pred_region
      %53 = dma.done [#allocation3], 64
    $region25: #{tpu_custom_call.1} parent=1 // pred_fallthru
      _
    // Predicated region
    $region26: #{tpu_custom_call.1} parent=1 // pred_check
      _
    $region27: #{tpu_custom_call.1} parent=1 // pred_check_branch
      %55 = sbr.rel (0) target = $region29
    $region28: #{tpu_custom_call.1} parent=1 // pred_region
      %56 = dma.done [#allocation6], 2048
    $region29: #{tpu_custom_call.1} parent=1 // pred_fallthru
      _
    // Predicated region
    $region30: #{tpu_custom_call.1} parent=1 // pred_check
      _
    $region31: #{tpu_custom_call.1} parent=1 // pred_check_branch
      %58 = sbr.rel (0) target = $region33
    $region32: #{tpu_custom_call.1} parent=1 // pred_region
      %59 = dma.done [#allocation6], 2048
    $region33: #{tpu_custom_call.1} parent=1 // pred_fallthru
      _
    %v61 = vld [vmem:[#allocation2] sm:$0xf]
    %v62 = vld [vmem:[#allocation5] sm:$0xff]
    %v63 = vld [vmem:[#allocation5 + $0x8] sm:$0xff]
    %v64 = vld [vmem:[#allocation5 + $0x10] sm:$0xff]
    %v65 = vld [vmem:[#allocation5 + $0x18] sm:$0xff]
    %v66 = vld [vmem:[#allocation5 + $0x20] sm:$0xff]
    %v67 = vld [vmem:[#allocation5 + $0x28] sm:$0xff]
    %v68 = vld [vmem:[#allocation5 + $0x30] sm:$0xff]
    %v69 = vld [vmem:[#allocation5 + $0x38] sm:$0xff]
    %v70 = vld [vmem:[#allocation5 + $0x40] sm:$0xff]
    %v71 = vld [vmem:[#allocation5 + $0x48] sm:$0xff]
    %v72 = vld [vmem:[#allocation5 + $0x50] sm:$0xff]
    %v73 = vld [vmem:[#allocation5 + $0x58] sm:$0xff]
    %v74 = vld [vmem:[#allocation5 + $0x60] sm:$0xff]
    %v75 = vld [vmem:[#allocation5 + $0x68] sm:$0xff]
    %v76 = vld [vmem:[#allocation5 + $0x70] sm:$0xff]
    %v77 = vld [vmem:[#allocation5 + $0x78] sm:$0xff]
    %v78 = vld [vmem:[%s2] sm:$0x3]
    %v80 = vlaneseq
    %v81 = vshrl.u32 %v80, 7
    %v82 = vsub.s32 0, %v81
    %v83 = vrot.slane %v78, %v82
    %v84 = vlaneseq
    %v85 = vshrl.u32 %v84, 7
    %v86 = vsub.s32 1, %v85
    %v87 = vrot.slane %v78, %v86
    %v106 = vunpack.c.l.b16 %v62
    %v107 = vunpack.c.h.b16 %v62
    %v108 = vunpack.c.l.b16 %v63
    %v109 = vunpack.c.h.b16 %v63
    %v110 = vunpack.c.l.b16 %v64
    %v111 = vunpack.c.h.b16 %v64
    %v112 = vunpack.c.l.b16 %v65
    %v113 = vunpack.c.h.b16 %v65
    %v114 = vunpack.c.l.b16 %v66
    %v115 = vunpack.c.h.b16 %v66
    %v116 = vunpack.c.l.b16 %v67
    %v117 = vunpack.c.h.b16 %v67
    %v118 = vunpack.c.l.b16 %v68
    %v119 = vunpack.c.h.b16 %v68
    %v120 = vunpack.c.l.b16 %v69
    %v121 = vunpack.c.h.b16 %v69
    %v122 = vunpack.c.l.b16 %v70
    %v123 = vunpack.c.h.b16 %v70
    %v124 = vunpack.c.l.b16 %v71
    %v125 = vunpack.c.h.b16 %v71
    %v126 = vunpack.c.l.b16 %v72
    %v127 = vunpack.c.h.b16 %v72
    %v128 = vunpack.c.l.b16 %v73
    %v129 = vunpack.c.h.b16 %v73
    %v130 = vunpack.c.l.b16 %v74
    %v131 = vunpack.c.h.b16 %v74
    %v132 = vunpack.c.l.b16 %v75
    %v133 = vunpack.c.h.b16 %v75
    %v134 = vunpack.c.l.b16 %v76
    %v135 = vunpack.c.h.b16 %v76
    %v136 = vunpack.c.l.b16 %v77
    %v137 = vunpack.c.h.b16 %v77
    %v138 = vpack.c.b16 %v108, %v106
    %v139 = vpack.c.b16 %v109, %v107
    %v140 = vpack.c.b16 %v112, %v110
    %v141 = vpack.c.b16 %v113, %v111
    %v142 = vpack.c.b16 %v116, %v114
    %v143 = vpack.c.b16 %v117, %v115
    %v144 = vpack.c.b16 %v120, %v118
    %v145 = vpack.c.b16 %v121, %v119
    %v146 = vpack.c.b16 %v124, %v122
    %v147 = vpack.c.b16 %v125, %v123
    %v148 = vpack.c.b16 %v128, %v126
    %v149 = vpack.c.b16 %v129, %v127
    %v150 = vpack.c.b16 %v132, %v130
    %v151 = vpack.c.b16 %v133, %v131
    %v152 = vpack.c.b16 %v136, %v134
    %v153 = vpack.c.b16 %v137, %v135
    %170 = vmatprep.subr.bf16.mxu0 %v153
    %171 = vmatpush1.bf16.msra.mxu0 %v152
    %172 = vmatprep.subr.bf16.mxu0 %v151
    %173 = vmatpush1.bf16.msra.mxu0 %v150
    %174 = vmatprep.subr.bf16.mxu0 %v149
    %175 = vmatpush1.bf16.msra.mxu0 %v148
    %176 = vmatprep.subr.bf16.mxu0 %v147
    %177 = vmatpush1.bf16.msra.mxu0 %v146
    %178 = vmatprep.subr.bf16.mxu0 %v145
    %179 = vmatpush1.bf16.msra.mxu0 %v144
    %180 = vmatprep.subr.bf16.mxu0 %v143
    %181 = vmatpush1.bf16.msra.mxu0 %v142
    %182 = vmatprep.subr.bf16.mxu0 %v141
    %183 = vmatpush1.bf16.msra.mxu0 %v140
    %184 = vmatprep.subr.bf16.mxu0 %v139
    %185 = vmatpush1.bf16.msra.mxu0 %v138
    %186 = vmatprep.subr.bf16.mxu0 0
    %187 = vmatpush2.bf16.msra.mxu0 0
    %188 = vmatprep.subr.bf16.mxu0 0
    %189 = vmatpush2.bf16.msra.mxu0 0
    %190 = vmatprep.subr.bf16.mxu0 0
    %191 = vmatpush2.bf16.msra.mxu0 0
    %192 = vmatprep.subr.bf16.mxu0 0
    %193 = vmatpush2.bf16.msra.mxu0 0
    %194 = vmatprep.subr.bf16.mxu0 0
    %195 = vmatpush2.bf16.msra.mxu0 0
    %196 = vmatprep.subr.bf16.mxu0 0
    %197 = vmatpush2.bf16.msra.mxu0 0
    %198 = vmatprep.subr.bf16.mxu0 0
    %199 = vmatpush2.bf16.msra.mxu0 0
    %200 = vmatprep.subr.bf16.mxu0 0
    %201 = vmatpush2.bf16.msra.mxu0 0
    %202 = vmatprep.mubr.bf16.mxu0 0
    %203 = vmatmul.mubr.bf16.gmra.mxu0 %v61
    %v204 = vpop.f32.mrf.mxu0
    %v205 = vadd.f32 %v83, %v204
    %v206 = vpop.f32.mrf.mxu0
    %v207 = vadd.f32 %v87, %v206
    %v208 = vpop.f32.mrf.mxu0
    %v209 = vpop.f32.mrf.mxu0
    %210 = vdwg.mxu0
    %v211 = vmax.f32 %v205, 0.0
    %v212 = vmax.f32 %v207, 0.0
    %v213 = vpack.c.bf16 %v211, %v211
    %v214 = vpack.c.bf16 %v212, %v212
    %v215 = vld [vmem:[#allocation7] sm:$0xf]
    %v216 = vld [vmem:[#allocation7 + $0x4] sm:$0xf]
    %v217 = vld [vmem:[#allocation7 + $0x8] sm:$0xf]
    %v218 = vld [vmem:[#allocation7 + $0xc] sm:$0xf]
    %v219 = vld [vmem:[#allocation7 + $0x10] sm:$0xf]
    %v220 = vld [vmem:[#allocation7 + $0x14] sm:$0xf]
    %v221 = vld [vmem:[#allocation7 + $0x18] sm:$0xf]
    %v222 = vld [vmem:[#allocation7 + $0x1c] sm:$0xf]
    %v223 = vld [vmem:[#allocation7 + $0x20] sm:$0xf]
    %v224 = vld [vmem:[#allocation7 + $0x24] sm:$0xf]
    %v225 = vld [vmem:[#allocation7 + $0x28] sm:$0xf]
    %v226 = vld [vmem:[#allocation7 + $0x2c] sm:$0xf]
    %v227 = vld [vmem:[#allocation7 + $0x30] sm:$0xf]
    %v228 = vld [vmem:[#allocation7 + $0x34] sm:$0xf]
    %v229 = vld [vmem:[#allocation7 + $0x38] sm:$0xf]
    %v230 = vld [vmem:[#allocation7 + $0x3c] sm:$0xf]
    %v231 = vld [vmem:[#allocation7 + $0x40] sm:$0xf]
    %v232 = vld [vmem:[#allocation7 + $0x44] sm:$0xf]
    %v233 = vld [vmem:[#allocation7 + $0x48] sm:$0xf]
    %v234 = vld [vmem:[#allocation7 + $0x4c] sm:$0xf]
    %v235 = vld [vmem:[#allocation7 + $0x50] sm:$0xf]
    %v236 = vld [vmem:[#allocation7 + $0x54] sm:$0xf]
    %v237 = vld [vmem:[#allocation7 + $0x58] sm:$0xf]
    %v238 = vld [vmem:[#allocation7 + $0x5c] sm:$0xf]
    %v239 = vld [vmem:[#allocation7 + $0x60] sm:$0xf]
    %v240 = vld [vmem:[#allocation7 + $0x64] sm:$0xf]
    %v241 = vld [vmem:[#allocation7 + $0x68] sm:$0xf]
    %v242 = vld [vmem:[#allocation7 + $0x6c] sm:$0xf]
    %v243 = vld [vmem:[#allocation7 + $0x70] sm:$0xf]
    %v244 = vld [vmem:[#allocation7 + $0x74] sm:$0xf]
    %v245 = vld [vmem:[#allocation7 + $0x78] sm:$0xf]
    %v246 = vld [vmem:[#allocation7 + $0x7c] sm:$0xf]
    %v247 = vld [vmem:[%s4] sm:$0x1]
    %v249 = vlaneseq
    %v250 = vshrl.u32 %v249, 7
    %v251 = vsub.s32 0, %v250
    %v252 = vrot.slane %v247, %v251
    %v286 = vunpack.c.l.b16 %v215
    %v287 = vunpack.c.l.b16 %v216
    %v288 = vunpack.c.l.b16 %v217
    %v289 = vunpack.c.l.b16 %v218
    %v290 = vunpack.c.l.b16 %v219
    %v291 = vunpack.c.l.b16 %v220
    %v292 = vunpack.c.l.b16 %v221
    %v293 = vunpack.c.l.b16 %v222
    %v294 = vunpack.c.l.b16 %v223
    %v295 = vunpack.c.l.b16 %v224
    %v296 = vunpack.c.l.b16 %v225
    %v297 = vunpack.c.l.b16 %v226
    %v298 = vunpack.c.l.b16 %v227
    %v299 = vunpack.c.l.b16 %v228
    %v300 = vunpack.c.l.b16 %v229
    %v301 = vunpack.c.l.b16 %v230
    %v302 = vunpack.c.l.b16 %v231
    %v303 = vunpack.c.l.b16 %v232
    %v304 = vunpack.c.l.b16 %v233
    %v305 = vunpack.c.l.b16 %v234
    %v306 = vunpack.c.l.b16 %v235
    %v307 = vunpack.c.l.b16 %v236
    %v308 = vunpack.c.l.b16 %v237
    %v309 = vunpack.c.l.b16 %v238
    %v310 = vunpack.c.l.b16 %v239
    %v311 = vunpack.c.l.b16 %v240
    %v312 = vunpack.c.l.b16 %v241
    %v313 = vunpack.c.l.b16 %v242
    %v314 = vunpack.c.l.b16 %v243
    %v315 = vunpack.c.l.b16 %v244
    %v316 = vunpack.c.l.b16 %v245
    %v317 = vunpack.c.l.b16 %v246
    %v318 = vpack.c.b16 %v287, %v286
    %v319 = vpack.c.b16 %v289, %v288
    %v320 = vpack.c.b16 %v291, %v290
    %v321 = vpack.c.b16 %v293, %v292
    %v322 = vpack.c.b16 %v295, %v294
    %v323 = vpack.c.b16 %v297, %v296
    %v324 = vpack.c.b16 %v299, %v298
    %v325 = vpack.c.b16 %v301, %v300
    %v326 = vpack.c.b16 %v303, %v302
    %v327 = vpack.c.b16 %v305, %v304
    %v328 = vpack.c.b16 %v307, %v306
    %v329 = vpack.c.b16 %v309, %v308
    %v330 = vpack.c.b16 %v311, %v310
    %v331 = vpack.c.b16 %v313, %v312
    %v332 = vpack.c.b16 %v315, %v314
    %v333 = vpack.c.b16 %v317, %v316
    %350 = vmatprep.subr.bf16.mxu0 0
    %351 = vmatpush1.bf16.msra.mxu0 %v325
    %352 = vmatprep.subr.bf16.mxu0 0
    %353 = vmatpush1.bf16.msra.mxu0 %v324
    %354 = vmatprep.subr.bf16.mxu0 0
    %355 = vmatpush1.bf16.msra.mxu0 %v323
    %356 = vmatprep.subr.bf16.mxu0 0
    %357 = vmatpush1.bf16.msra.mxu0 %v322
    %358 = vmatprep.subr.bf16.mxu0 0
    %359 = vmatpush1.bf16.msra.mxu0 %v321
    %360 = vmatprep.subr.bf16.mxu0 0
    %361 = vmatpush1.bf16.msra.mxu0 %v320
    %362 = vmatprep.subr.bf16.mxu0 0
    %363 = vmatpush1.bf16.msra.mxu0 %v319
    %364 = vmatprep.subr.bf16.mxu0 0
    %365 = vmatpush1.bf16.msra.mxu0 %v318
    %366 = vmatprep.subr.bf16.mxu0 0
    %367 = vmatpush2.bf16.msra.mxu0 %v333
    %368 = vmatprep.subr.bf16.mxu0 0
    %369 = vmatpush2.bf16.msra.mxu0 %v332
    %370 = vmatprep.subr.bf16.mxu0 0
    %371 = vmatpush2.bf16.msra.mxu0 %v331
    %372 = vmatprep.subr.bf16.mxu0 0
    %373 = vmatpush2.bf16.msra.mxu0 %v330
    %374 = vmatprep.subr.bf16.mxu0 0
    %375 = vmatpush2.bf16.msra.mxu0 %v329
    %376 = vmatprep.subr.bf16.mxu0 0
    %377 = vmatpush2.bf16.msra.mxu0 %v328
    %378 = vmatprep.subr.bf16.mxu0 0
    %379 = vmatpush2.bf16.msra.mxu0 %v327
    %380 = vmatprep.subr.bf16.mxu0 0
    %381 = vmatpush2.bf16.msra.mxu0 %v326
    %382 = vmatprep.mubr.bf16.mxu0 %v214
    %383 = vmatmul.mubr.bf16.gmra.mxu0 %v213
    %v384 = vpop.f32.mrf.mxu0
    %v385 = vadd.f32 %v252, %v384
    %v386 = vpop.f32.mrf.mxu0
    %v387 = vpop.f32.mrf.mxu0
    %v388 = vpop.f32.mrf.mxu0
    %389 = vdwg.mxu0
    %390 = vst [vmem:[#allocation8] sm:$0xff] %v385
    // Predicated region
    $region34: #{tpu_custom_call.1} parent=1 // pred_check
      _
    $region35: #{tpu_custom_call.1} parent=1 // pred_check_branch
      %392 = sbr.rel (0) target = $region37
    $region36: #{tpu_custom_call.1} parent=1 // pred_region
      %s394 = ssub.s32 128, 128
      %395 = vsyncadd [#allocation4], %s394
      %s397 = sshll.u32 [#allocation8], 4
      %s398 = int_to_ptr.vmem [resolvable:$true] %s397
      %400 = dma.vmem_to_hbm [thread:$0]  %s398, 128, %s5, [#allocation4]
    $region37: #{tpu_custom_call.1} parent=1 // pred_fallthru
      _
    // Predicated region
    $region38: #{tpu_custom_call.1} parent=1 // pred_check
      _
    $region39: #{tpu_custom_call.1} parent=1 // pred_check_branch
      %402 = sbr.rel (0) target = $region41
    $region40: #{tpu_custom_call.1} parent=1 // pred_region
      %403 = dma.done [#allocation4], 128
    $region41: #{tpu_custom_call.1} parent=1 // pred_fallthru
      _
    %404 = vsyncpa [#allocation3], 1
    %405 = vsyncpa [#allocation6], 1
    %406 = vsyncpa [#allocation4], 1

</llo_original>
